<compile_context>
chip_gen: v6e
topology: v6e:2x2x1
jax: 0.10.0
libtpu: 0.0.40
codegen_flags: <defaults>
</compile_context>

<pallas_src>
import jax
import jax.numpy as jnp
from jax.experimental import pallas as pl
from jax.experimental.pallas import tpu as pltpu


# --------------------------------------------------------------------------
# Kernel
# --------------------------------------------------------------------------
def _attn_decoder_kernel(el_ref, x_ref, o_ref):
    # refs are (bB, L, tD) VMEM tiles; the full L (reduction) axis is resident.
    # Elementwise work is done in f32 on every generation: the kernel is
    # purely HBM-bound, so the extra VALU/EUP work is free, and it keeps the
    # result identical to the f32 framework reference (also avoids bf16
    # emulation overhead on v5e, which has no bf16 VPU/EUP).
    x = x_ref[...].astype(jnp.float32)
    el = el_ref[...].astype(jnp.float32)

    px = jax.nn.sigmoid(x)
    pl_ = jax.nn.sigmoid(el)
    pxpl = px * pl_

    # Sum over dim=-2 (the L axis) in f32; exact divide for the normalization
    # (no approx reciprocal, no bf16 downcast of 1/denom).
    denom = jnp.sum(pxpl, axis=-2, keepdims=True)          # (bB, 1, tD)
    attn = pxpl / denom                                    # broadcast over L

    o_ref[...] = (attn * x).astype(o_ref.dtype)


# --------------------------------------------------------------------------
# Tile selection
# --------------------------------------------------------------------------
def _choose_tiles(B, L, D, itemsize, target_tile_bytes):
    """Pick (bB, tD): batch block and lane block.  L is never tiled."""
    total_bytes = B * L * D * itemsize
    per_batch_bytes = L * D * itemsize

    if per_batch_bytes >= target_tile_bytes:
        # One batch element already meets the budget: tile the lane axis in
        # 128-multiples (lane-dense, unmasked stores) when possible.
        if D % 128 == 0:
            per_group_bytes = L * 128 * itemsize
            groups = max(1, target_tile_bytes // per_group_bytes)
            tD = min(D, groups * 128)
            return 1, tD
        # TODO(synk): D not a multiple of 128 with huge L*D would need an
        # L-tiled two-pass (running-denominator) path; for now keep the full
        # lane extent (valid BlockSpec, correct, but large for extreme shapes).
        return 1, D

    # Pack as many batch elements as fit the per-tile budget (cdiv grid below
    # pads/masks any ragged batch edge).
    bB = min(B, max(1, target_tile_bytes // per_batch_bytes))

    # v7x megacore: if the tensor is non-trivial, keep >= 2 grid steps along
    # the "parallel" batch axis so both TensorCores get work.
    if bB >= B and B >= 2 and total_bytes > (2 << 20):
        bB = pl.cdiv(B, 2)

    return bB, D


# --------------------------------------------------------------------------
# Wrapper
# --------------------------------------------------------------------------
def attention_decoder(El, X, *, target_tile_bytes=2 << 20):
    """Pallas equivalent of Attentiondecoder.forward(El, X); El, X: (B, L, D)."""
    assert El.shape == X.shape, "El and X must share shape (B, L, D)"
    B, L, D = X.shape
    itemsize = jnp.dtype(X.dtype).itemsize

    bB, tD = _choose_tiles(B, L, D, itemsize, target_tile_bytes)
    grid = (pl.cdiv(B, bB), pl.cdiv(D, tD))

    spec = pl.BlockSpec((bB, L, tD), lambda b, d: (b, 0, d))

    grid_spec = pltpu.PrefetchScalarGridSpec(
        num_scalar_prefetch=0,
        grid=grid,
        in_specs=[spec, spec],   # El, X
        out_specs=spec,
    )

    return pl.pallas_call(
        _attn_decoder_kernel,
        out_shape=jax.ShapeDtypeStruct((B, L, D), X.dtype),
        grid_spec=grid_spec,
        compiler_params=pltpu.CompilerParams(
            dimension_semantics=("parallel", "parallel"),
            # 3 arrays x 2 pipeline buffers x ~2 MiB tiles + a few f32
            # whole-tile temporaries (pxpl, upcasts) fits comfortably under
            # this on v5e/v6e (128 MiB phys) and v7x (64 MiB phys).
            vmem_limit_bytes=48 * 1024 * 1024,
        ),
    )(El, X)


# --------------------------------------------------------------------------
# Reference + test
# --------------------------------------------------------------------------
def _reference(El, X):
    x = X.astype(jnp.float32)
    el = El.astype(jnp.float32)
    px = jax.nn.sigmoid(x)
    pl_ = jax.nn.sigmoid(el)
    pxpl = px * pl_
    attn = pxpl / jnp.sum(pxpl, axis=-2, keepdims=True)
    return (attn * x).astype(X.dtype)


if __name__ == "__main__":
    key = jax.random.PRNGKey(0)
    kx, kl, kx2, kl2, kx3, kl3 = jax.random.split(key, 6)

    # --- main check: batch=2, len=8, dim=128, f32 (single-block path) ---
    B, L, D = 2, 8, 128
    X = jax.random.normal(kx, (B, L, D), dtype=jnp.float32)
    El = jax.random.normal(kl, (B, L, D), dtype=jnp.float32)
    out = jax.block_until_ready(attention_decoder(El, X))
    ref = _reference(El, X)
    assert out.shape == (B, L, D)
    assert jnp.allclose(out, ref, atol=1e-4, rtol=1e-4), "f32 mismatch vs reference"

    # --- ragged-edge check: B=3 with a batch block of 2 (cdiv grid path) ---
    B2, L2, D2 = 3, 8, 128
    X2 = jax.random.normal(kx2, (B2, L2, D2), dtype=jnp.float32)
    El2 = jax.random.normal(kl2, (B2, L2, D2), dtype=jnp.float32)
    out2 = jax.block_until_ready(
        attention_decoder(El2, X2, target_tile_bytes=8 * 1024))
    ref2 = _reference(El2, X2)
    assert jnp.allclose(out2, ref2, atol=1e-4, rtol=1e-4), "ragged mismatch vs reference"

    # --- bf16 I/O check (compute stays f32 inside the kernel) ---
    B3, L3, D3 = 2, 8, 256
    X3 = jax.random.normal(kx3, (B3, L3, D3), dtype=jnp.bfloat16)
    El3 = jax.random.normal(kl3, (B3, L3, D3), dtype=jnp.bfloat16)
    out3 = jax.block_until_ready(attention_decoder(El3, X3))
    ref3 = _reference(El3, X3)
    assert jnp.allclose(out3.astype(jnp.float32), ref3.astype(jnp.float32),
                        atol=2e-2, rtol=2e-2), "bf16 mismatch vs reference"

    print("KERNEL_OK")
</pallas_src>

<mosaic_0001>
module attributes {stable_mosaic.version = 11 : i64} {
  func.func @_attn_decoder_kernel(%arg0: i32, %arg1: i32, %arg2: memref<2x8x128xf32, #tpu.memory_space<vmem>>, %arg3: memref<2x8x128xf32, #tpu.memory_space<vmem>>, %arg4: memref<2x8x128xf32, #tpu.memory_space<vmem>>) attributes {dimension_semantics = [#tpu.dimension_semantics<parallel>, #tpu.dimension_semantics<parallel>], iteration_bounds = array<i64: 1, 1>, scalar_prefetch = 0 : i64, scratch_operands = 0 : i64, tpu.core_type = #tpu.core_type<tc>, window_params = [{transform_indices = @transform_0, window_bounds = array<i64: 2, 8, 128>}, {transform_indices = @transform_1, window_bounds = array<i64: 2, 8, 128>}, {transform_indices = @transform_2, window_bounds = array<i64: 2, 8, 128>}]} {
    %c0 = arith.constant 0 : index
    %c0_0 = arith.constant 0 : index
    %c0_1 = arith.constant 0 : index
    %0 = vector.load %arg3[%c0, %c0_0, %c0_1] : memref<2x8x128xf32, #tpu.memory_space<vmem>>, vector<2x8x128xf32>
    %c0_2 = arith.constant 0 : index
    %c0_3 = arith.constant 0 : index
    %c0_4 = arith.constant 0 : index
    %1 = vector.load %arg2[%c0_2, %c0_3, %c0_4] : memref<2x8x128xf32, #tpu.memory_space<vmem>>, vector<2x8x128xf32>
    %2 = arith.negf %0 : vector<2x8x128xf32>
    %3 = math.exp %2 : vector<2x8x128xf32>
    %cst = arith.constant 1.000000e+00 : f32
    %4 = vector.broadcast %cst : f32 to vector<2x8x128xf32>
    %5 = arith.addf %4, %3 : vector<2x8x128xf32>
    %6 = arith.divf %4, %5 : vector<2x8x128xf32>
    %7 = arith.negf %1 : vector<2x8x128xf32>
    %8 = math.exp %7 : vector<2x8x128xf32>
    %cst_5 = arith.constant 1.000000e+00 : f32
    %9 = vector.broadcast %cst_5 : f32 to vector<2x8x128xf32>
    %10 = arith.addf %9, %8 : vector<2x8x128xf32>
    %11 = arith.divf %9, %10 : vector<2x8x128xf32>
    %12 = arith.mulf %6, %11 : vector<2x8x128xf32>
    %cst_6 = arith.constant dense<0.000000e+00> : vector<2x128xf32>
    %13 = vector.multi_reduction <add>, %12, %cst_6 [1] : vector<2x8x128xf32> to vector<2x128xf32>
    %14 = vector.shape_cast %13 : vector<2x128xf32> to vector<2x1x128xf32>
    %15 = vector.broadcast %14 : vector<2x1x128xf32> to vector<2x8x128xf32>
    %16 = arith.divf %12, %15 : vector<2x8x128xf32>
    %17 = arith.mulf %16, %0 : vector<2x8x128xf32>
    %c0_7 = arith.constant 0 : index
    %c0_8 = arith.constant 0 : index
    %c0_9 = arith.constant 0 : index
    %18 = vector.load %arg4[%c0_7, %c0_8, %c0_9] : memref<2x8x128xf32, #tpu.memory_space<vmem>>, vector<2x8x128xf32>
    tpu.vector_store %arg4[%c0_7, %c0_8, %c0_9], %17 {strides = array<i32>} : memref<2x8x128xf32, #tpu.memory_space<vmem>>, vector<2x8x128xf32>,
    return
  }
  func.func @transform_0(%arg0: i32, %arg1: i32) -> (i32, i32, i32) {
    %c0_i32 = arith.constant 0 : i32
    %c0_i32_0 = arith.constant 0 : i32
    return %arg0, %c0_i32, %arg1 : i32, i32, i32
  }
  func.func @transform_1(%arg0: i32, %arg1: i32) -> (i32, i32, i32) {
    %c0_i32 = arith.constant 0 : i32
    %c0_i32_0 = arith.constant 0 : i32
    return %arg0, %c0_i32, %arg1 : i32, i32, i32
  }
  func.func @transform_2(%arg0: i32, %arg1: i32) -> (i32, i32, i32) {
    %c0_i32 = arith.constant 0 : i32
    %c0_i32_0 = arith.constant 0 : i32
    return %arg0, %c0_i32, %arg1 : i32, i32, i32
  }
}

</mosaic_0001>

<llo_original>
// kernel: tpu_custom_call.1
$region0: #{tpu_custom_call.1}
  #allocation0 [shape = 'u32[]', space=smem, size = 0x4, offset = 0x4, fixed_abs, tag = 'smem constant byte address 0x4 - core index']
  #allocation1 [shape = 'u32[144,128]{1,0:T(1,128)}', space=vmem, size = 0x12000, scoped, tag = 'internal scratch']
  %s0 = inlined_call_operand.hbm [shape: f32[2,8,128], index: 0, kind: input, shape index: {}]
  %s1 = inlined_call_operand.hbm [shape: f32[2,8,128], index: 1, kind: input, shape index: {}]
  %s2 = inlined_call_operand.hbm [shape: f32[2,8,128], index: 2, kind: output, shape index: {}]
  %s3 = sld [smem:[#allocation0]]
  $region26: #{tpu_custom_call.1} parent=0
    _
  %s5 = ssub.s32 1, %s3
  %s6 = scalar_select 0, %s5, %s3
  $region1: #{tpu_custom_call.1} parent=0
    #allocation2 [shape = 'u8[8192]{0}', space=vmem, size = 0x2000, scoped, tag = 'input window, operand 0, single buffered']
    #allocation3 [shape = 's32[1]{0}', space=sflag, size = 0x4, scoped, tag = 'scoped memory for tpu_custom_call.1']
    #allocation4 [shape = 's32[1]{0}', space=sflag, size = 0x4, scoped, tag = 'scoped memory for tpu_custom_call.1']
    #allocation5 [shape = 'u8[8192]{0}', space=vmem, size = 0x2000, scoped, tag = 'input window, operand 1, single buffered']
    #allocation6 [shape = 's32[1]{0}', space=sflag, size = 0x4, scoped, tag = 'scoped memory for tpu_custom_call.1']
    #allocation7 [shape = 'u8[8192]{0}', space=vmem, size = 0x2000, scoped, tag = 'output window, operand 0, single buffered']
    %7 = vsyncpa [#allocation3], 0
    %8 = vsyncpa [#allocation6], 0
    %9 = vsyncpa [#allocation4], 0
    // Predicated region
    $region2: #{tpu_custom_call.1} parent=1 // pred_check
      _
    $region3: #{tpu_custom_call.1} parent=1 // pred_check_branch
      %11 = sbr.rel (0) target = $region5
    $region4: #{tpu_custom_call.1} parent=1 // pred_region
      %s13 = ssub.s32 256, 256
      %14 = vsyncadd [#allocation3], %s13
      %s15 = sshll.u32 [#allocation2], 4
      %s16 = int_to_ptr.vmem [resolvable:$true] %s15
      %21 = dma.hbm_to_vmem [thread:$0]  %s0, 256, %s16, [#allocation3], 128, 128, 8
    $region5: #{tpu_custom_call.1} parent=1 // pred_fallthru
      _
    // Predicated region
    $region6: #{tpu_custom_call.1} parent=1 // pred_check
      _
    $region7: #{tpu_custom_call.1} parent=1 // pred_check_branch
      %23 = sbr.rel (0) target = $region9
    $region8: #{tpu_custom_call.1} parent=1 // pred_region
      %s25 = ssub.s32 256, 256
      %26 = vsyncadd [#allocation6], %s25
      %s27 = sshll.u32 [#allocation5], 4
      %s28 = int_to_ptr.vmem [resolvable:$true] %s27
      %33 = dma.hbm_to_vmem [thread:$0]  %s1, 256, %s28, [#allocation6], 128, 128, 8
    $region9: #{tpu_custom_call.1} parent=1 // pred_fallthru
      _
    // Predicated region
    $region10: #{tpu_custom_call.1} parent=1 // pred_check
      _
    $region11: #{tpu_custom_call.1} parent=1 // pred_check_branch
      %35 = sbr.rel (0) target = $region13
    $region12: #{tpu_custom_call.1} parent=1 // pred_region
      %36 = dma.done [#allocation3], 256
    $region13: #{tpu_custom_call.1} parent=1 // pred_fallthru
      _
    // Predicated region
    $region14: #{tpu_custom_call.1} parent=1 // pred_check
      _
    $region15: #{tpu_custom_call.1} parent=1 // pred_check_branch
      %38 = sbr.rel (0) target = $region17
    $region16: #{tpu_custom_call.1} parent=1 // pred_region
      %39 = dma.done [#allocation6], 256
    $region17: #{tpu_custom_call.1} parent=1 // pred_fallthru
      _
    %v40 = vld [vmem:[#allocation5] sm:$0xff]
    %v41 = vld [vmem:[#allocation5 + $0x8] sm:$0xff]
    %v42 = vld [vmem:[#allocation2] sm:$0xff]
    %v43 = vld [vmem:[#allocation2 + $0x8] sm:$0xff]
    %v44 = vxor.u32 %v40, 2147483648
    %v45 = vxor.u32 %v41, 2147483648
    %v46 = vmul.f32 %v44, 1.442695
    %v47 = vpow.pop %v46
    %v48 = vmul.f32 %v45, 1.442695
    %v49 = vpow.pop %v48
    %v50 = vadd.f32 %v47, 1.0
    %v51 = vadd.f32 %v49, 1.0
    %v52 = vrcp.pop %v50
    %v53 = vmul.f32 1.0, %v52
    %v54 = vrcp.pop %v51
    %v55 = vmul.f32 1.0, %v54
    %v56 = vxor.u32 %v42, 2147483648
    %v57 = vxor.u32 %v43, 2147483648
    %v58 = vmul.f32 %v56, 1.442695
    %v59 = vpow.pop %v58
    %v60 = vmul.f32 %v57, 1.442695
    %v61 = vpow.pop %v60
    %v62 = vadd.f32 %v59, 1.0
    %v63 = vadd.f32 %v61, 1.0
    %v64 = vrcp.pop %v62
    %v65 = vmul.f32 1.0, %v64
    %v66 = vrcp.pop %v63
    %v67 = vmul.f32 1.0, %v66
    %v68 = vmul.f32 %v53, %v65
    %v69 = vmul.f32 %v55, %v67
    %v70 = vrot.slane %v68, 4
    %v71 = vadd.f32 %v68, %v70
    %v72 = vrot.slane %v71, 2
    %v73 = vadd.f32 %v71, %v72
    %v74 = vrot.slane %v73, 1
    %v75 = vadd.f32 %v73, %v74
    %v76 = vrot.slane %v69, 4
    %v77 = vadd.f32 %v69, %v76
    %v78 = vrot.slane %v77, 2
    %v79 = vadd.f32 %v77, %v78
    %v80 = vrot.slane %v79, 1
    %v81 = vadd.f32 %v79, %v80
    %v82 = vrcp.pop %v75
    %v83 = vmul.f32 %v68, %v82
    %v84 = vrcp.pop %v81
    %v85 = vmul.f32 %v69, %v84
    %v86 = vmul.f32 %v83, %v40
    %v87 = vmul.f32 %v85, %v41
    %88 = vst [vmem:[#allocation7] sm:$0xff] %v86
    %89 = vst [vmem:[#allocation7 + $0x8] sm:$0xff] %v87
    // Predicated region
    $region18: #{tpu_custom_call.1} parent=1 // pred_check
      _
    $region19: #{tpu_custom_call.1} parent=1 // pred_check_branch
      %91 = sbr.rel (0) target = $region21
    $region20: #{tpu_custom_call.1} parent=1 // pred_region
      %s93 = ssub.s32 256, 256
      %94 = vsyncadd [#allocation4], %s93
      %s95 = sshll.u32 [#allocation7], 4
      %s96 = int_to_ptr.vmem [resolvable:$true] %s95
      %101 = dma.vmem_to_hbm [thread:$0]  %s96, 256, %s2, [#allocation4], 128, 128, 8
    $region21: #{tpu_custom_call.1} parent=1 // pred_fallthru
      _
    // Predicated region
    $region22: #{tpu_custom_call.1} parent=1 // pred_check
      _
    $region23: #{tpu_custom_call.1} parent=1 // pred_check_branch
      %103 = sbr.rel (0) target = $region25
    $region24: #{tpu_custom_call.1} parent=1 // pred_region
      %104 = dma.done [#allocation4], 256
    $region25: #{tpu_custom_call.1} parent=1 // pred_fallthru
      _
    %105 = vsyncpa [#allocation3], 1
    %106 = vsyncpa [#allocation6], 1
    %107 = vsyncpa [#allocation4], 1

</llo_original>
